<compile_context>
chip_gen: v7x
topology: tpu7x:2x2x1
jax: 0.10.0
libtpu: 0.0.40
codegen_flags: <defaults>
</compile_context>

<pallas_src>
import math
from functools import partial

import jax
import jax.numpy as jnp
from jax.experimental import pallas as pl
from jax.experimental.pallas import tpu as pltpu


# ---------------------------------------------------------------------------
# Kernels
# ---------------------------------------------------------------------------

def _packed_matmul_kernel(x_ref, w_ref, b_ref, o_ref):
    """One batch tile: (tb, in_total) @ (in_total, out_total) + f32 bias.

    The block-diagonal structure and the channel-shuffle permutation are baked
    into w_ref's columns by the wrapper, so this is a single MXU dot with f32
    accumulation followed by one lane-dense store.
    """
    acc = jnp.dot(x_ref[...], w_ref[...], preferred_element_type=jnp.float32)
    o_ref[...] = (acc + b_ref[...]).astype(o_ref.dtype)


def _per_group_matmul_kernel(x_ref, w_ref, b_ref, o_ref):
    """Fallback (huge weights): one group's x_g @ W_g + b_g, direct store."""
    acc = jnp.dot(x_ref[...], w_ref[0], preferred_element_type=jnp.float32)
    o_ref[...] = (acc + b_ref[0]).astype(o_ref.dtype)


# ---------------------------------------------------------------------------
# Sizing helpers
# ---------------------------------------------------------------------------

def _vmem_capacity_bytes() -> int:
    """Physical VMEM of the current chip (conservative fallback = v7x 64 MiB)."""
    try:
        info = pltpu.get_tpu_info()
        cap = getattr(info, "vmem_capacity_bytes", None)
        if cap:
            return int(cap)
    except Exception:
        pass
    return 64 << 20


def _round_up(x: int, m: int) -> int:
    return ((x + m - 1) // m) * m


def _choose_batch_tile(B: int, bytes_per_row: int, fixed_bytes: int,
                       budget_bytes: int) -> int:
    """Largest tb (multiple of 8, <= 2048) whose double-buffered blocks fit."""
    avail = max(budget_bytes - fixed_bytes, bytes_per_row * 8)
    tb = min(2048, avail // bytes_per_row)
    tb = max(8, (int(tb) // 8) * 8)
    if B < 8:
        return max(B, 1)                      # block == full batch dim (legal)
    return int(min(tb, _round_up(B, 8)))      # no point exceeding the batch


# ---------------------------------------------------------------------------
# Public wrapper
# ---------------------------------------------------------------------------

def grouped_linear(x, weights, biases, *, groups, shuffle=True,
                   batch_tile=None, compute_dtype="auto", out_dtype=None,
                   x_buffer_count=2):
    """Pallas implementation of GroupedLinear.forward.

    x:       [..., groups * in_pg]
    weights: (groups, in_pg, hid_pg)   (already transposed vs torch's (out, in))
    biases:  (groups, hid_pg)
    compute_dtype: "auto" (default: bf16 streaming for f32 inputs), None
                   (= x.dtype, exact), or an explicit dtype. Accumulation and
                   the bias add are always f32.
    out_dtype: output dtype (default: x.dtype).
    """
    orig_lead = x.shape[:-1]
    in_total = x.shape[-1]
    g, in_pg, hid_pg = weights.shape
    assert g == groups and groups * in_pg == in_total
    out_total = groups * hid_pg
    if out_dtype is None:
        out_dtype = x.dtype
    if groups == 1:
        shuffle = False  # matches torch (and the permutation would be identity)

    # Compute dtype selection (review: bf16 streaming default on f32 inputs).
    if compute_dtype is None:
        cdt = x.dtype
    elif isinstance(compute_dtype, str):
        assert compute_dtype == "auto"
        cdt = jnp.bfloat16 if x.dtype == jnp.float32 else x.dtype
    else:
        cdt = jnp.dtype(compute_dtype)

    B = int(math.prod(orig_lead)) if orig_lead else 1
    x2 = x.reshape(B, in_total)
    if x2.dtype != jnp.dtype(cdt):
        # NOTE: standalone this cast is one extra activation pass; in a full
        # model the producer should emit `cdt` directly so it disappears.
        x2 = x2.astype(cdt)

    x_it = jnp.dtype(cdt).itemsize
    o_it = jnp.dtype(out_dtype).itemsize
    w_it = jnp.dtype(cdt).itemsize

    cap = _vmem_capacity_bytes()
    budget = cap // 2  # 64 MiB on v5e/v6e (128 MiB VMEM), 32 MiB on v7x

    packed_w_bytes = in_total * out_total * w_it
    aligned = (in_pg % 128 == 0) and (hid_pg % 128 == 0)
    use_packed = (packed_w_bytes <= min(budget // 2, 16 << 20)) or not aligned
    # TODO(synk): a very large AND non-128-aligned per-group weight would force
    # the packed path past VMEM; add a K/N-tiled variant if that shape appears.

    if use_packed:
        # ------------------------------------------------------------------
        # Path A (default): block-diagonal weight pack with the channel
        # shuffle baked into the column order. Single matmul per batch tile.
        # ------------------------------------------------------------------
        w_full = jnp.zeros((in_total, out_total), dtype=weights.dtype)
        for gi in range(groups):  # trace-time, tiny weight arrays
            w_full = w_full.at[gi * in_pg:(gi + 1) * in_pg,
                               gi * hid_pg:(gi + 1) * hid_pg].set(weights[gi])
        b_full = biases.reshape(out_total)
        if shuffle and groups > 1:
            # torch shuffle: out.view(-1, hid_pg, groups).transpose(-1,-2)
            #                   .reshape(orig)
            # == per-row column permutation perm[b*hid_pg + a] = a*groups + b.
            perm = jnp.arange(out_total).reshape(hid_pg, groups).T.reshape(-1)
            w_full = w_full[:, perm]
            b_full = b_full[perm]
        w_full = w_full.astype(cdt)
        b_full = b_full.reshape(1, out_total).astype(jnp.float32)

        per_row = 2 * (in_total * x_it + out_total * o_it)
        fixed = 2 * packed_w_bytes + 2 * out_total * 4
        if batch_tile is not None:
            tb = int(batch_tile)
        else:
            tb = _choose_batch_tile(B, per_row, fixed, budget)
        if B < 8:
            tb = B
        else:
            tb = max(8, min((tb // 8) * 8, _round_up(B, 8)))

        n_tiles = pl.cdiv(B, tb)  # ragged last tile handled by Pallas: no pad

        need = 2 * tb * (in_total * x_it + out_total * o_it) + fixed
        vmem_limit = int(min(max(need * 5 // 4 + (4 << 20), 32 << 20),
                             cap * 3 // 4))

        x_spec_kwargs = {}
        if x_buffer_count != 2:
            # e.g. 3 on v7x if profiling shows exposed input DMA.
            x_spec_kwargs["pipeline_mode"] = pl.Buffered(int(x_buffer_count))

        in_specs = [
            pl.BlockSpec((tb, in_total), lambda i: (i, 0), **x_spec_kwargs),
            # Constant index maps -> weight & bias DMA'd once, VMEM-resident.
            pl.BlockSpec((in_total, out_total), lambda i: (0, 0)),
            pl.BlockSpec((1, out_total), lambda i: (0, 0)),
        ]
        out_spec = pl.BlockSpec((tb, out_total), lambda i: (i, 0))

        cost = pl.CostEstimate(
            flops=2 * B * in_total * out_total,
            transcendentals=0,
            bytes_accessed=(B * in_total * x_it + packed_w_bytes
                            + out_total * 4 + B * out_total * o_it),
        )

        out_flat = pl.pallas_call(
            _packed_matmul_kernel,
            out_shape=jax.ShapeDtypeStruct((B, out_total), out_dtype),
            grid=(n_tiles,),
            in_specs=in_specs,
            out_specs=out_spec,
            compiler_params=pltpu.CompilerParams(
                # Single parallel batch axis: megacore / v7x 2-TC split lands on
                # the batch dimension; the tiny weight is resident on each core.
                dimension_semantics=("parallel",),
                vmem_limit_bytes=vmem_limit,
            ),
            cost_estimate=cost,
        )(x2, w_full, b_full)

        return out_flat.reshape(orig_lead + (out_total,))

    # ----------------------------------------------------------------------
    # Path B (fallback, huge 128-aligned per-group weights): group axis outer,
    # batch axis inner -> each group's weight stays VMEM-resident across all
    # batch tiles; direct lane-dense per-group stores (no concat).
    # ----------------------------------------------------------------------
    w3 = weights.astype(cdt)
    b3 = biases.reshape(groups, 1, hid_pg).astype(jnp.float32)

    per_row = 2 * (in_pg * x_it + hid_pg * o_it)
    fixed = 2 * (in_pg * hid_pg * w_it + hid_pg * 4)
    if batch_tile is not None:
        tb = int(batch_tile)
    else:
        tb = _choose_batch_tile(B, per_row, fixed, budget)
    if B < 8:
        tb = B
    else:
        tb = max(8, min((tb // 8) * 8, _round_up(B, 8)))
    n_tiles = pl.cdiv(B, tb)

    need = 2 * tb * (in_pg * x_it + hid_pg * o_it) + fixed
    vmem_limit = int(min(max(need * 5 // 4 + (4 << 20), 32 << 20), cap * 3 // 4))

    out_flat = pl.pallas_call(
        _per_group_matmul_kernel,
        out_shape=jax.ShapeDtypeStruct((B, out_total), out_dtype),
        grid=(groups, n_tiles),   # group OUTER, batch INNER -> weight residency
        in_specs=[
            pl.BlockSpec((tb, in_pg), lambda gi, i: (i, gi)),
            pl.BlockSpec((1, in_pg, hid_pg), lambda gi, i: (gi, 0, 0)),
            pl.BlockSpec((1, 1, hid_pg), lambda gi, i: (gi, 0, 0)),
        ],
        out_specs=pl.BlockSpec((tb, hid_pg), lambda gi, i: (i, gi)),
        compiler_params=pltpu.CompilerParams(
            dimension_semantics=("arbitrary", "parallel"),
            vmem_limit_bytes=vmem_limit,
        ),
        cost_estimate=pl.CostEstimate(
            flops=2 * B * in_total * hid_pg,
            transcendentals=0,
            bytes_accessed=(B * in_total * x_it + groups * in_pg * hid_pg * w_it
                            + out_total * 4 + B * out_total * o_it),
        ),
    )(x2, w3, b3)

    output = out_flat.reshape(orig_lead + (out_total,))
    if shuffle and groups > 1:
        # TODO(synk): extra output pass only on this huge-weight fallback path;
        # the default packed path bakes the shuffle into the weight columns.
        perm = jnp.arange(out_total).reshape(hid_pg, groups).T.reshape(-1)
        output = output[..., perm]
    return output


# ---------------------------------------------------------------------------
# Reference + tests
# ---------------------------------------------------------------------------

def _reference(x, weights, biases, groups, shuffle):
    """Pure-JAX reference reproducing the torch forward exactly."""
    g, in_pg, hid_pg = weights.shape
    outs = []
    for i in range(groups):
        xi = x[..., i * in_pg:(i + 1) * in_pg]
        outs.append(xi @ weights[i] + biases[i])
    out = jnp.concatenate(outs, axis=-1)
    if shuffle and groups > 1:
        orig_shape = out.shape
        out = out.reshape(-1, hid_pg, groups).swapaxes(-1, -2).reshape(orig_shape)
    return out


def _make_params(key, groups, input_size, hidden_size):
    in_pg = input_size // groups
    hid_pg = hidden_size // groups
    kw, kb = jax.random.split(key)
    bound = 1.0 / math.sqrt(in_pg)  # nn.Linear default init range
    weights = jax.random.uniform(kw, (groups, in_pg, hid_pg), jnp.float32,
                                 minval=-bound, maxval=bound)
    biases = jax.random.uniform(kb, (groups, hid_pg), jnp.float32,
                                minval=-bound, maxval=bound)
    return weights, biases


if __name__ == "__main__":
    key = jax.random.PRNGKey(0)
    kx, kx2, kp1, kp2 = jax.random.split(key, 4)

    input_size = hidden_size = 256

    # --- Case 1: groups=2, shuffle=True, exact f32 compute ---
    groups = 2
    weights, biases = _make_params(kp1, groups, input_size, hidden_size)
    x = jax.random.normal(kx, (2, 8, input_size), jnp.float32)
    fn = jax.jit(partial(grouped_linear, groups=groups, shuffle=True,
                         compute_dtype=jnp.float32))
    out = jax.block_until_ready(fn(x, weights, biases))
    ref = _reference(x, weights, biases, groups, True)
    assert out.shape == (2, 8, hidden_size), out.shape
    assert jnp.allclose(out, ref, atol=1e-5, rtol=1e-5), "f32 groups=2 mismatch"

    # --- Case 2: groups=4 (per-group dims = 64, not 128-aligned), exact f32 ---
    groups4 = 4
    weights4, biases4 = _make_params(kp2, groups4, input_size, hidden_size)
    fn4 = jax.jit(partial(grouped_linear, groups=groups4, shuffle=True,
                          compute_dtype=jnp.float32))
    out4 = jax.block_until_ready(fn4(x, weights4, biases4))
    ref4 = _reference(x, weights4, biases4, groups4, True)
    assert jnp.allclose(out4, ref4, atol=1e-5, rtol=1e-5), "f32 groups=4 mismatch"

    # --- Case 3: default bf16 streaming path (f32 accumulation), loose tol ---
    fn_bf16 = jax.jit(partial(grouped_linear, groups=groups, shuffle=True))
    out_bf16 = jax.block_until_ready(fn_bf16(x, weights, biases))
    assert out_bf16.dtype == x.dtype
    assert jnp.allclose(out_bf16, ref, atol=3e-2, rtol=3e-2), "bf16 mismatch"

    # --- Case 4: ragged batch (B=15, tile=8) -> no pad/slice round trips ---
    x_rag = jax.random.normal(kx2, (3, 5, input_size), jnp.float32)
    fn_rag = jax.jit(partial(grouped_linear, groups=groups, shuffle=True,
                             compute_dtype=jnp.float32, batch_tile=8))
    out_rag = jax.block_until_ready(fn_rag(x_rag, weights, biases))
    ref_rag = _reference(x_rag, weights, biases, groups, True)
    assert jnp.allclose(out_rag, ref_rag, atol=1e-5, rtol=1e-5), "ragged mismatch"

    # --- Case 5: shuffle=False ---
    fn_ns = jax.jit(partial(grouped_linear, groups=groups, shuffle=False,
                            compute_dtype=jnp.float32))
    out_ns = jax.block_until_ready(fn_ns(x, weights, biases))
    ref_ns = _reference(x, weights, biases, groups, False)
    assert jnp.allclose(out_ns, ref_ns, atol=1e-5, rtol=1e-5), "no-shuffle mismatch"

    print("KERNEL_OK")
</pallas_src>

<mosaic_0001>
module attributes {stable_mosaic.version = 11 : i64} {
  func.func @_packed_matmul_kernel(%arg0: i32, %arg1: memref<16x256xf32, #tpu.memory_space<vmem>>, %arg2: memref<256x256xf32, #tpu.memory_space<vmem>>, %arg3: memref<1x256xf32, #tpu.memory_space<vmem>>, %arg4: memref<16x256xf32, #tpu.memory_space<vmem>>) attributes {dimension_semantics = [#tpu.dimension_semantics<parallel>], iteration_bounds = array<i64: 1>, scalar_prefetch = 0 : i64, scratch_operands = 0 : i64, tpu.core_type = #tpu.core_type<tc>, window_params = [{transform_indices = @transform_0, window_bounds = array<i64: 16, 256>}, {pipeline_mode = #tpu.pipeline_mode<synchronous>, transform_indices = @transform_1, window_bounds = array<i64: 256, 256>}, {pipeline_mode = #tpu.pipeline_mode<synchronous>, transform_indices = @transform_2, window_bounds = array<i64: 1, 256>}, {transform_indices = @transform_3, window_bounds = array<i64: 16, 256>}]} {
    %c0 = arith.constant 0 : index
    %c0_0 = arith.constant 0 : index
    %0 = vector.load %arg1[%c0, %c0_0] : memref<16x256xf32, #tpu.memory_space<vmem>>, vector<16x256xf32>
    %c0_1 = arith.constant 0 : index
    %c0_2 = arith.constant 0 : index
    %1 = vector.load %arg2[%c0_1, %c0_2] : memref<256x256xf32, #tpu.memory_space<vmem>>, vector<256x256xf32>
    %cst = arith.constant dense<0.000000e+00> : vector<16x256xf32>
    %2 = tpu.matmul %0, %1, %cst {dimension_numbers = #tpu.dot_dimension_numbers<[1], [0], [0], [1], [0, 0, 1, 1], [], []>} : vector<16x256xf32>, vector<256x256xf32>, vector<16x256xf32> -> vector<16x256xf32>
    %c0_3 = arith.constant 0 : index
    %c0_4 = arith.constant 0 : index
    %3 = vector.load %arg3[%c0_3, %c0_4] : memref<1x256xf32, #tpu.memory_space<vmem>>, vector<1x256xf32>
    %4 = vector.broadcast %3 : vector<1x256xf32> to vector<16x256xf32>
    %5 = arith.addf %2, %4 : vector<16x256xf32>
    %c0_5 = arith.constant 0 : index
    %c0_6 = arith.constant 0 : index
    %6 = vector.load %arg4[%c0_5, %c0_6] : memref<16x256xf32, #tpu.memory_space<vmem>>, vector<16x256xf32>
    tpu.vector_store %arg4[%c0_5, %c0_6], %5 {strides = array<i32>} : memref<16x256xf32, #tpu.memory_space<vmem>>, vector<16x256xf32>,
    return
  }
  func.func @transform_0(%arg0: i32) -> (i32, i32) {
    %c0_i32 = arith.constant 0 : i32
    %c0_i32_0 = arith.constant 0 : i32
    return %arg0, %c0_i32 : i32, i32
  }
  func.func @transform_1(%arg0: i32) -> (i32, i32) {
    %c0_i32 = arith.constant 0 : i32
    %c0_i32_0 = arith.constant 0 : i32
    %c0_i32_1 = arith.constant 0 : i32
    return %c0_i32, %c0_i32_0 : i32, i32
  }
  func.func @transform_2(%arg0: i32) -> (i32, i32) {
    %c0_i32 = arith.constant 0 : i32
    %c0_i32_0 = arith.constant 0 : i32
    %c0_i32_1 = arith.constant 0 : i32
    return %c0_i32, %c0_i32_0 : i32, i32
  }
  func.func @transform_3(%arg0: i32) -> (i32, i32) {
    %c0_i32 = arith.constant 0 : i32
    %c0_i32_0 = arith.constant 0 : i32
    return %arg0, %c0_i32 : i32, i32
  }
}

</mosaic_0001>

<llo_original>
// kernel: grouped_linear.1
$region0: #{grouped_linear.1}
  #allocation0 [shape = 'u32[]', space=smem, size = 0x4, offset = 0x4, fixed_abs, tag = 'smem constant byte address 0x4 - core index']
  #allocation1 [shape = 'u32[144,128]{1,0:T(1,128)}', space=vmem, size = 0x12000, scoped, tag = 'internal scratch']
  %s0 = inlined_call_operand.vmem [shape: f32[16,256], index: 0, kind: input, shape index: {}]
  %s1 = inlined_call_operand.vmem [shape: f32[256,256], index: 1, kind: input, shape index: {}]
  %s2 = inlined_call_operand.vmem [shape: f32[1,256], index: 2, kind: input, shape index: {}]
  %s3 = inlined_call_operand.hbm [shape: f32[16,256], index: 3, kind: output, shape index: {}]
  %s4 = sld [smem:[#allocation0]]
  $region22: #{grouped_linear.1} parent=0
    _
  %s6 = ssub.s32 1, %s4
  %s7 = scalar_select 0, %s6, %s4
  $region1: #{grouped_linear.1} parent=0
    #allocation2 [shape = 'u8[16384]{0}', space=vmem, size = 0x4000, scoped, tag = 'output window, operand 0, single buffered']
    #allocation3 [shape = 's32[1]{0}', space=sflag, size = 0x4, scoped, tag = 'scoped memory for grouped_linear.1']
    %8 = vsyncpa [#allocation3], 0
    // Predicated region
    $region2: #{grouped_linear.1} parent=1 // pred_check
      _
    $region3: #{grouped_linear.1} parent=1 // pred_check_branch
      %10 = sbr.rel (0) target = $region5
    $region4: #{grouped_linear.1} parent=1 // pred_region
      _
    $region5: #{grouped_linear.1} parent=1 // pred_fallthru
      _
    // Predicated region
    $region6: #{grouped_linear.1} parent=1 // pred_check
      _
    $region7: #{grouped_linear.1} parent=1 // pred_check_branch
      %12 = sbr.rel (0) target = $region9
    $region8: #{grouped_linear.1} parent=1 // pred_region
      _
    $region9: #{grouped_linear.1} parent=1 // pred_fallthru
      _
    // Predicated region
    $region10: #{grouped_linear.1} parent=1 // pred_check
      _
    $region11: #{grouped_linear.1} parent=1 // pred_check_branch
      %14 = sbr.rel (0) target = $region13
    $region12: #{grouped_linear.1} parent=1 // pred_region
      _
    $region13: #{grouped_linear.1} parent=1 // pred_fallthru
      _
    %v15 = vld [vmem:[%s0] sm:$0xff]
    %v16 = vld [vmem:[%s0 + $0x8] sm:$0xff]
    %v17 = vld [vmem:[%s0 + $0x10] sm:$0xff]
    %v18 = vld [vmem:[%s0 + $0x18] sm:$0xff]
    %v19 = vld [vmem:[%s1] sm:$0xff]
    %v20 = vld [vmem:[%s1 + $0x8] sm:$0xff]
    %v21 = vld [vmem:[%s1 + $0x10] sm:$0xff]
    %v22 = vld [vmem:[%s1 + $0x18] sm:$0xff]
    %v23 = vld [vmem:[%s1 + $0x20] sm:$0xff]
    %v24 = vld [vmem:[%s1 + $0x28] sm:$0xff]
    %v25 = vld [vmem:[%s1 + $0x30] sm:$0xff]
    %v26 = vld [vmem:[%s1 + $0x38] sm:$0xff]
    %v27 = vld [vmem:[%s1 + $0x40] sm:$0xff]
    %v28 = vld [vmem:[%s1 + $0x48] sm:$0xff]
    %v29 = vld [vmem:[%s1 + $0x50] sm:$0xff]
    %v30 = vld [vmem:[%s1 + $0x58] sm:$0xff]
    %v31 = vld [vmem:[%s1 + $0x60] sm:$0xff]
    %v32 = vld [vmem:[%s1 + $0x68] sm:$0xff]
    %v33 = vld [vmem:[%s1 + $0x70] sm:$0xff]
    %v34 = vld [vmem:[%s1 + $0x78] sm:$0xff]
    %v35 = vld [vmem:[%s1 + $0x80] sm:$0xff]
    %v36 = vld [vmem:[%s1 + $0x88] sm:$0xff]
    %v37 = vld [vmem:[%s1 + $0x90] sm:$0xff]
    %v38 = vld [vmem:[%s1 + $0x98] sm:$0xff]
    %v39 = vld [vmem:[%s1 + $0xa0] sm:$0xff]
    %v40 = vld [vmem:[%s1 + $0xa8] sm:$0xff]
    %v41 = vld [vmem:[%s1 + $0xb0] sm:$0xff]
    %v42 = vld [vmem:[%s1 + $0xb8] sm:$0xff]
    %v43 = vld [vmem:[%s1 + $0xc0] sm:$0xff]
    %v44 = vld [vmem:[%s1 + $0xc8] sm:$0xff]
    %v45 = vld [vmem:[%s1 + $0xd0] sm:$0xff]
    %v46 = vld [vmem:[%s1 + $0xd8] sm:$0xff]
    %v47 = vld [vmem:[%s1 + $0xe0] sm:$0xff]
    %v48 = vld [vmem:[%s1 + $0xe8] sm:$0xff]
    %v49 = vld [vmem:[%s1 + $0xf0] sm:$0xff]
    %v50 = vld [vmem:[%s1 + $0xf8] sm:$0xff]
    %v51 = vld [vmem:[%s1 + $0x100] sm:$0xff]
    %v52 = vld [vmem:[%s1 + $0x108] sm:$0xff]
    %v53 = vld [vmem:[%s1 + $0x110] sm:$0xff]
    %v54 = vld [vmem:[%s1 + $0x118] sm:$0xff]
    %v55 = vld [vmem:[%s1 + $0x120] sm:$0xff]
    %v56 = vld [vmem:[%s1 + $0x128] sm:$0xff]
    %v57 = vld [vmem:[%s1 + $0x130] sm:$0xff]
    %v58 = vld [vmem:[%s1 + $0x138] sm:$0xff]
    %v59 = vld [vmem:[%s1 + $0x140] sm:$0xff]
    %v60 = vld [vmem:[%s1 + $0x148] sm:$0xff]
    %v61 = vld [vmem:[%s1 + $0x150] sm:$0xff]
    %v62 = vld [vmem:[%s1 + $0x158] sm:$0xff]
    %v63 = vld [vmem:[%s1 + $0x160] sm:$0xff]
    %v64 = vld [vmem:[%s1 + $0x168] sm:$0xff]
    %v65 = vld [vmem:[%s1 + $0x170] sm:$0xff]
    %v66 = vld [vmem:[%s1 + $0x178] sm:$0xff]
    %v67 = vld [vmem:[%s1 + $0x180] sm:$0xff]
    %v68 = vld [vmem:[%s1 + $0x188] sm:$0xff]
    %v69 = vld [vmem:[%s1 + $0x190] sm:$0xff]
    %v70 = vld [vmem:[%s1 + $0x198] sm:$0xff]
    %v71 = vld [vmem:[%s1 + $0x1a0] sm:$0xff]
    %v72 = vld [vmem:[%s1 + $0x1a8] sm:$0xff]
    %v73 = vld [vmem:[%s1 + $0x1b0] sm:$0xff]
    %v74 = vld [vmem:[%s1 + $0x1b8] sm:$0xff]
    %v75 = vld [vmem:[%s1 + $0x1c0] sm:$0xff]
    %v76 = vld [vmem:[%s1 + $0x1c8] sm:$0xff]
    %v77 = vld [vmem:[%s1 + $0x1d0] sm:$0xff]
    %v78 = vld [vmem:[%s1 + $0x1d8] sm:$0xff]
    %v79 = vld [vmem:[%s1 + $0x1e0] sm:$0xff]
    %v80 = vld [vmem:[%s1 + $0x1e8] sm:$0xff]
    %v81 = vld [vmem:[%s1 + $0x1f0] sm:$0xff]
    %v82 = vld [vmem:[%s1 + $0x1f8] sm:$0xff]
    %v83 = vld [vmem:[%s2] sm:$0x3]
    %v85 = vlaneseq
    %v86 = vshrl.u32 %v85, 7
    %v87 = vsub.s32 0, %v86
    %v88 = vrot.slane %v83, %v87
    %v89 = vlaneseq
    %v90 = vshrl.u32 %v89, 7
    %v91 = vsub.s32 1, %v90
    %v92 = vrot.slane %v83, %v91
    %95 = vmatprep.subr.mxu0 %v20
    %96 = vmatpush1.msra.mxu0 %v19
    %97 = vmatprep.subr.mxu0 %v22
    %98 = vmatpush1.msra.mxu0 %v21
    %99 = vmatprep.subr.mxu0 %v24
    %100 = vmatpush1.msra.mxu0 %v23
    %101 = vmatprep.subr.mxu0 %v26
    %102 = vmatpush1.msra.mxu0 %v25
    %103 = vmatprep.subr.mxu0 %v28
    %104 = vmatpush1.msra.mxu0 %v27
    %105 = vmatprep.subr.mxu0 %v30
    %106 = vmatpush1.msra.mxu0 %v29
    %107 = vmatprep.subr.mxu0 %v32
    %108 = vmatpush1.msra.mxu0 %v31
    %109 = vmatprep.subr.mxu0 %v34
    %110 = vmatpush1.msra.mxu0 %v33
    %111 = vmatprep.subr.mxu0 %v36
    %112 = vmatpush1.msra.mxu0 %v35
    %113 = vmatprep.subr.mxu0 %v38
    %114 = vmatpush1.msra.mxu0 %v37
    %115 = vmatprep.subr.mxu0 %v40
    %116 = vmatpush1.msra.mxu0 %v39
    %117 = vmatprep.subr.mxu0 %v42
    %118 = vmatpush1.msra.mxu0 %v41
    %119 = vmatprep.subr.mxu0 %v44
    %120 = vmatpush1.msra.mxu0 %v43
    %121 = vmatprep.subr.mxu0 %v46
    %122 = vmatpush1.msra.mxu0 %v45
    %123 = vmatprep.subr.mxu0 %v48
    %124 = vmatpush1.msra.mxu0 %v47
    %125 = vmatprep.subr.mxu0 %v50
    %126 = vmatpush1.msra.mxu0 %v49
    %127 = vmatprep.subr.mxu0 %v52
    %128 = vmatpush1.msra.mxu0 %v51
    %129 = vmatprep.subr.mxu0 %v54
    %130 = vmatpush1.msra.mxu0 %v53
    %131 = vmatprep.subr.mxu0 %v56
    %132 = vmatpush1.msra.mxu0 %v55
    %133 = vmatprep.subr.mxu0 %v58
    %134 = vmatpush1.msra.mxu0 %v57
    %135 = vmatprep.subr.mxu0 %v60
    %136 = vmatpush1.msra.mxu0 %v59
    %137 = vmatprep.subr.mxu0 %v62
    %138 = vmatpush1.msra.mxu0 %v61
    %139 = vmatprep.subr.mxu0 %v64
    %140 = vmatpush1.msra.mxu0 %v63
    %141 = vmatprep.subr.mxu0 %v66
    %142 = vmatpush1.msra.mxu0 %v65
    %143 = vmatprep.subr.mxu0 %v68
    %144 = vmatpush1.msra.mxu0 %v67
    %145 = vmatprep.subr.mxu0 %v70
    %146 = vmatpush1.msra.mxu0 %v69
    %147 = vmatprep.subr.mxu0 %v72
    %148 = vmatpush1.msra.mxu0 %v71
    %149 = vmatprep.subr.mxu0 %v74
    %150 = vmatpush1.msra.mxu0 %v73
    %151 = vmatprep.subr.mxu0 %v76
    %152 = vmatpush1.msra.mxu0 %v75
    %153 = vmatprep.subr.mxu0 %v78
    %154 = vmatpush1.msra.mxu0 %v77
    %155 = vmatprep.subr.mxu0 %v80
    %156 = vmatpush1.msra.mxu0 %v79
    %157 = vmatprep.subr.mxu0 %v82
    %158 = vmatpush1.msra.mxu0 %v81
    %159 = vmatprep.mubr.f32.mxu0 %v16
    %160 = vmatmul.mubr.f32.gmra.mrb[0].mxu0 %v15
    %v161 = vpop.f32.mrb[0].mxu0
    %v162 = vadd.f32 %v88, %v161
    %v163 = vpop.f32.mrb[0].mxu0
    %v164 = vadd.f32 %v92, %v163
    %165 = vmatprep.mubr.f32.mxu0 %v18
    %166 = vmatmul.mubr.f32.gmra.mrb[0].mxu0 %v17
    %v167 = vpop.f32.mrb[0].mxu0
    %v168 = vadd.f32 %v88, %v167
    %v169 = vpop.f32.mrb[0].mxu0
    %v170 = vadd.f32 %v92, %v169
    %171 = vdwg.mxu0
    %172 = vst [vmem:[#allocation2] sm:$0xff] %v162
    %173 = vst [vmem:[#allocation2 + $0x8] sm:$0xff] %v164
    %174 = vst [vmem:[#allocation2 + $0x10] sm:$0xff] %v168
    %175 = vst [vmem:[#allocation2 + $0x18] sm:$0xff] %v170
    // Predicated region
    $region14: #{grouped_linear.1} parent=1 // pred_check
      _
    $region15: #{grouped_linear.1} parent=1 // pred_check_branch
      %177 = sbr.rel (0) target = $region17
    $region16: #{grouped_linear.1} parent=1 // pred_region
      %s179 = ssub.s32 512, 512
      %180 = vsyncadd [#allocation3], %s179
      %s181 = sshll.u32 [#allocation2], 4
      %s182 = int_to_ptr.vmem [resolvable:$true] %s181
      %187 = dma.vmem_to_hbm [thread:$0]  %s182, 512, %s3, [#allocation3], 256, 256, 16
    $region17: #{grouped_linear.1} parent=1 // pred_fallthru
      _
    // Predicated region
    $region18: #{grouped_linear.1} parent=1 // pred_check
      _
    $region19: #{grouped_linear.1} parent=1 // pred_check_branch
      %189 = sbr.rel (0) target = $region21
    $region20: #{grouped_linear.1} parent=1 // pred_region
      %190 = dma.done [#allocation3], 512
    $region21: #{grouped_linear.1} parent=1 // pred_fallthru
      _
    %191 = vsyncpa [#allocation3], 1

</llo_original>
